<compile_context>
chip_gen: v6e
topology: v6e:2x2x1
jax: 0.10.0
libtpu: 0.0.40
codegen_flags: <defaults>
</compile_context>

<pallas_src>
import functools

import jax
import jax.numpy as jnp
from jax import lax
from jax.experimental import pallas as pl
from jax.experimental.pallas import tpu as pltpu

LANE = 128  # TPU lane width; d_out is padded to a multiple of this.


def _self_attention_kernel(x_ref, wqkv_ref, o_ref, *, d_pad, scale):
    x = x_ref[...]            # [S, d_in]
    wqkv = wqkv_ref[...]      # [d_in, 3*d_pad] == [Wq | Wk | Wv], each zero-padded to d_pad

    # Fused QKV projection: one MXU matmul, f32 accumulation.
    qkv = jnp.dot(x, wqkv, preferred_element_type=jnp.float32)    # [S, 3*d_pad]
    q = qkv[:, 0 * d_pad:1 * d_pad]                               # [S, d_pad]
    k = qkv[:, 1 * d_pad:2 * d_pad]
    v = qkv[:, 2 * d_pad:3 * d_pad]

    # Fold 1/sqrt(d_out) into Q (cheaper than scaling the [S, S] scores).
    q = q * scale

    # Q @ K^T without an explicit transpose: contract the last axes directly.
    # Zero-padded lanes of Q/K contribute 0 to the contraction, so scores are exact.
    scores = lax.dot_general(
        q, k,
        dimension_numbers=(((1,), (1,)), ((), ())),
        preferred_element_type=jnp.float32)                       # [S, S]

    # Numerically stable softmax with normalization deferred past the PV matmul.
    m = jnp.max(scores, axis=-1, keepdims=True)                   # [S, 1]
    p = jnp.exp(scores - m)                                       # [S, S] (unnormalized)
    denom = jnp.sum(p, axis=-1, keepdims=True)                    # [S, 1]

    ctx = jnp.dot(p, v, preferred_element_type=jnp.float32)       # [S, d_pad]
    # approx=True -> EUP vrcp slot (separate VLIW slot from the VALU).
    ctx = ctx * pl.reciprocal(denom, approx=True)

    # Lane-dense store: full [S, d_pad] block (padded tail lanes are exactly 0).
    o_ref[...] = ctx.astype(o_ref.dtype)


def prepare_qkv_weight(w_query, w_key, w_value):
    """One-time parameter prep: fused, lane-padded QKV weight [d_in, 3*d_pad].

    Hoisted out of the per-call wrapper so the padded weight is materialized
    once at init rather than re-built and re-DMA'd on every forward call.
    w_*: [d_in, d_out] (== nn.Linear.weight.T, bias-free).
    """
    d_out = w_query.shape[1]
    d_pad = max(((d_out + LANE - 1) // LANE) * LANE, LANE)

    def pad_cols(w):
        return jnp.pad(w, ((0, 0), (0, d_pad - d_out)))

    wqkv = jnp.concatenate(
        [pad_cols(w_query), pad_cols(w_key), pad_cols(w_value)], axis=1)
    return wqkv, d_out, d_pad


def self_attention_v2(x, wqkv, d_out, d_pad):
    """x: [S, d_in]; wqkv: [d_in, 3*d_pad] from prepare_qkv_weight."""
    S, _ = x.shape

    # Scale uses the *unpadded* key width, matching keys.shape[-1] in the reference.
    scale = float(d_out) ** -0.5

    kernel = functools.partial(_self_attention_kernel, d_pad=d_pad, scale=scale)
    out_padded = pl.pallas_call(
        kernel,
        out_shape=jax.ShapeDtypeStruct((S, d_pad), x.dtype),
        # No grid: single invocation, whole-array VMEM blocks — the problem is
        # tiny, so grid machinery would be pure fixed overhead.  Explicit VMEM
        # placement removes any ambiguity about where operands live.
        in_specs=[
            pl.BlockSpec(memory_space=pltpu.MemorySpace.VMEM),   # x
            pl.BlockSpec(memory_space=pltpu.MemorySpace.VMEM),   # wqkv
        ],
        out_specs=pl.BlockSpec(memory_space=pltpu.MemorySpace.VMEM),
        compiler_params=pltpu.CompilerParams(
            vmem_limit_bytes=32 * 1024 * 1024),
    )(x, wqkv)

    return out_padded[:, :d_out]


def reference(x, w_query, w_key, w_value):
    q = x @ w_query
    k = x @ w_key
    v = x @ w_value
    scores = q @ k.T
    w = jax.nn.softmax(scores / (k.shape[-1] ** 0.5), axis=-1)
    return w @ v


if __name__ == "__main__":
    # Same inputs as the PyTorch script (6 tokens, d_in=3, d_out=2).
    inputs = jnp.array(
        [[0.43, 0.15, 0.89],
         [0.55, 0.87, 0.66],
         [0.57, 0.85, 0.64],
         [0.22, 0.58, 0.33],
         [0.77, 0.25, 0.10],
         [0.05, 0.80, 0.55]], dtype=jnp.float32)

    d_in = inputs.shape[1]
    d_out = 2

    # Deterministic parameter init (mirrors torch.rand -> uniform [0, 1);
    # bias-free, matching qkv_bias=False).
    key = jax.random.PRNGKey(0)
    kq, kk, kv = jax.random.split(key, 3)
    W_query = jax.random.uniform(kq, (d_in, d_out), dtype=jnp.float32)
    W_key = jax.random.uniform(kk, (d_in, d_out), dtype=jnp.float32)
    W_value = jax.random.uniform(kv, (d_in, d_out), dtype=jnp.float32)

    # One-time parameter prep (hoisted out of the forward path).
    wqkv, d_out_real, d_pad = prepare_qkv_weight(W_query, W_key, W_value)
    wqkv = jax.block_until_ready(wqkv)

    out = self_attention_v2(inputs, wqkv, d_out_real, d_pad)
    out = jax.block_until_ready(out)

    ref = reference(inputs, W_query, W_key, W_value)
    assert out.shape == (inputs.shape[0], d_out), out.shape
    # Tolerance loosened (1e-3) to accommodate the approx-reciprocal epilogue.
    assert jnp.allclose(out, ref, atol=1e-3, rtol=1e-3), (out, ref)

    print("KERNEL_OK")
</pallas_src>

<mosaic_0001>
module attributes {stable_mosaic.version = 11 : i64} {
  func.func @_self_attention_kernel(%arg0: memref<6x3xf32, #tpu.memory_space<vmem>>, %arg1: memref<3x384xf32, #tpu.memory_space<vmem>>, %arg2: memref<6x128xf32, #tpu.memory_space<vmem>>) attributes {dimension_semantics = [], scalar_prefetch = 0 : i64, scratch_operands = 0 : i64, tpu.core_type = #tpu.core_type<tc>} {
    %c0 = arith.constant 0 : index
    %c0_0 = arith.constant 0 : index
    %0 = vector.load %arg0[%c0, %c0_0] : memref<6x3xf32, #tpu.memory_space<vmem>>, vector<6x3xf32>
    %c0_1 = arith.constant 0 : index
    %c0_2 = arith.constant 0 : index
    %1 = vector.load %arg1[%c0_1, %c0_2] : memref<3x384xf32, #tpu.memory_space<vmem>>, vector<3x384xf32>
    %cst = arith.constant dense<0.000000e+00> : vector<6x384xf32>
    %2 = tpu.matmul %0, %1, %cst {dimension_numbers = #tpu.dot_dimension_numbers<[1], [0], [0], [1], [0, 0, 1, 1], [], []>} : vector<6x3xf32>, vector<3x384xf32>, vector<6x384xf32> -> vector<6x384xf32>
    %3 = vector.extract_strided_slice %2 {offsets = [0, 0], sizes = [6, 128], strides = [1, 1]} : vector<6x384xf32> to vector<6x128xf32>
    %4 = vector.extract_strided_slice %2 {offsets = [0, 128], sizes = [6, 128], strides = [1, 1]} : vector<6x384xf32> to vector<6x128xf32>
    %5 = vector.extract_strided_slice %2 {offsets = [0, 256], sizes = [6, 128], strides = [1, 1]} : vector<6x384xf32> to vector<6x128xf32>
    %cst_3 = arith.constant 0.707106769 : f32
    %6 = vector.broadcast %cst_3 : f32 to vector<6x128xf32>
    %7 = arith.mulf %3, %6 : vector<6x128xf32>
    %cst_4 = arith.constant dense<0.000000e+00> : vector<6x6xf32>
    %8 = tpu.matmul %7, %4, %cst_4 {dimension_numbers = #tpu.dot_dimension_numbers<[1], [1], [0], [0], [0, 0, 1, 0], [], []>} : vector<6x128xf32>, vector<6x128xf32>, vector<6x6xf32> -> vector<6x6xf32>
    %cst_5 = arith.constant dense<0xFF800000> : vector<6xf32>
    %9 = vector.multi_reduction <maximumf>, %8, %cst_5 [1] : vector<6x6xf32> to vector<6xf32>
    %10 = vector.shape_cast %9 : vector<6xf32> to vector<6x1xf32>
    %11 = vector.broadcast %10 : vector<6x1xf32> to vector<6x6xf32>
    %12 = arith.subf %8, %11 : vector<6x6xf32>
    %13 = math.exp %12 : vector<6x6xf32>
    %cst_6 = arith.constant dense<0.000000e+00> : vector<6xf32>
    %14 = vector.multi_reduction <add>, %13, %cst_6 [1] : vector<6x6xf32> to vector<6xf32>
    %15 = vector.shape_cast %14 : vector<6xf32> to vector<6x1xf32>
    %cst_7 = arith.constant dense<0.000000e+00> : vector<6x128xf32>
    %16 = tpu.matmul %13, %5, %cst_7 {dimension_numbers = #tpu.dot_dimension_numbers<[1], [0], [0], [1], [0, 0, 1, 1], [], []>} : vector<6x6xf32>, vector<6x128xf32>, vector<6x128xf32> -> vector<6x128xf32>
    %17 = tpu.reciprocal %15 {approx = true} : vector<6x1xf32> -> vector<6x1xf32>
    %18 = vector.broadcast %17 : vector<6x1xf32> to vector<6x128xf32>
    %19 = arith.mulf %16, %18 : vector<6x128xf32>
    %c0_8 = arith.constant 0 : index
    %c0_9 = arith.constant 0 : index
    %20 = vector.load %arg2[%c0_8, %c0_9] : memref<6x128xf32, #tpu.memory_space<vmem>>, vector<6x128xf32>
    tpu.vector_store %arg2[%c0_8, %c0_9], %19 {strides = array<i32>} : memref<6x128xf32, #tpu.memory_space<vmem>>, vector<6x128xf32>,
    return
  }
}

</mosaic_0001>

<llo_original>
// kernel: tpu_custom_call.1
$region0: #{tpu_custom_call.1}
  #allocation0 [shape = 'u32[]', space=smem, size = 0x4, offset = 0x4, fixed_abs, tag = 'smem constant byte address 0x4 - core index']
  #allocation1 [shape = 'u32[144,128]{1,0:T(1,128)}', space=vmem, size = 0x12000, scoped, tag = 'internal scratch']
  %s0 = inlined_call_operand.vmem [shape: f32[6,3], index: 0, kind: input, shape index: {}]
  %s1 = inlined_call_operand.vmem [shape: f32[3,384], index: 1, kind: input, shape index: {}]
  %s2 = inlined_call_operand.hbm [shape: f32[6,128], index: 2, kind: output, shape index: {}]
  %s3 = sld [smem:[#allocation0]]
  $region18: #{tpu_custom_call.1} parent=0
    _
  %s5 = ssub.s32 1, %s3
  %s6 = scalar_select 0, %s5, %s3
  $region1: #{tpu_custom_call.1} parent=0
    #allocation2 [shape = 'u8[4096]{0}', space=vmem, size = 0x1000, scoped, tag = 'output window, operand 0, single buffered']
    #allocation3 [shape = 's32[1]{0}', space=sflag, size = 0x4, scoped, tag = 'scoped memory for tpu_custom_call.1']
    %7 = vsyncpa [#allocation3], 0
    // Predicated region
    $region2: #{tpu_custom_call.1} parent=1 // pred_check
      _
    $region3: #{tpu_custom_call.1} parent=1 // pred_check_branch
      %9 = sbr.rel (0) target = $region5
    $region4: #{tpu_custom_call.1} parent=1 // pred_region
      _
    $region5: #{tpu_custom_call.1} parent=1 // pred_fallthru
      _
    // Predicated region
    $region6: #{tpu_custom_call.1} parent=1 // pred_check
      _
    $region7: #{tpu_custom_call.1} parent=1 // pred_check_branch
      %11 = sbr.rel (0) target = $region9
    $region8: #{tpu_custom_call.1} parent=1 // pred_region
      _
    $region9: #{tpu_custom_call.1} parent=1 // pred_fallthru
      _
    %v12 = vld [vmem:[%s0] sm:$0x3f]
    %v13 = vld [vmem:[%s1] sm:$0x77]
    %v14 = vld [vmem:[%s1 + $0x8] sm:$0x7]
    %v17 = vcombine.high %v13, %v13
    %vm18 = vcmask 23552
    %v20 = vsel %vm18, %v12, 0
    %vm22 = vcmask 1042432
    %v23 = vsel %vm22, %v13, 0
    %v25 = vsel %vm22, %v17, 0
    %v27 = vsel %vm22, %v14, 0
    %29 = vmatprep.subr.mxu0 0.0
    %30 = vmatpush1.msra.mxu0 0.0
    %31 = vmatprep.subr.mxu0 0.0
    %32 = vmatpush1.msra.mxu0 0.0
    %33 = vmatprep.subr.mxu0 0.0
    %34 = vmatpush1.msra.mxu0 0.0
    %35 = vmatprep.subr.mxu0 0.0
    %36 = vmatpush1.msra.mxu0 0.0
    %37 = vmatprep.subr.mxu0 0.0
    %38 = vmatpush1.msra.mxu0 0.0
    %39 = vmatprep.subr.mxu0 0.0
    %40 = vmatpush1.msra.mxu0 0.0
    %41 = vmatprep.subr.mxu0 0.0
    %42 = vmatpush1.msra.mxu0 0.0
    %43 = vmatprep.subr.mxu0 0.0
    %44 = vmatpush1.msra.mxu0 0.0
    %45 = vmatprep.subr.mxu0 0.0
    %46 = vmatpush1.msra.mxu0 0.0
    %47 = vmatprep.subr.mxu0 0.0
    %48 = vmatpush1.msra.mxu0 0.0
    %49 = vmatprep.subr.mxu0 0.0
    %50 = vmatpush1.msra.mxu0 0.0
    %51 = vmatprep.subr.mxu0 0.0
    %52 = vmatpush1.msra.mxu0 0.0
    %53 = vmatprep.subr.mxu0 0.0
    %54 = vmatpush1.msra.mxu0 0.0
    %55 = vmatprep.subr.mxu0 0.0
    %56 = vmatpush1.msra.mxu0 0.0
    %57 = vmatprep.subr.mxu0 0.0
    %58 = vmatpush1.msra.mxu0 0.0
    %59 = vmatprep.subr.mxu0 %v25
    %60 = vmatpush1.msra.mxu0 %v23
    %61 = vmatprep.subr.mxu0 0.0
    %62 = vmatpush2.msra.mxu0 0.0
    %63 = vmatprep.subr.mxu0 0.0
    %64 = vmatpush2.msra.mxu0 0.0
    %65 = vmatprep.subr.mxu0 0.0
    %66 = vmatpush2.msra.mxu0 0.0
    %67 = vmatprep.subr.mxu0 0.0
    %68 = vmatpush2.msra.mxu0 0.0
    %69 = vmatprep.subr.mxu0 0.0
    %70 = vmatpush2.msra.mxu0 0.0
    %71 = vmatprep.subr.mxu0 0.0
    %72 = vmatpush2.msra.mxu0 0.0
    %73 = vmatprep.subr.mxu0 0.0
    %74 = vmatpush2.msra.mxu0 0.0
    %75 = vmatprep.subr.mxu0 0.0
    %76 = vmatpush2.msra.mxu0 0.0
    %77 = vmatprep.subr.mxu0 0.0
    %78 = vmatpush2.msra.mxu0 0.0
    %79 = vmatprep.subr.mxu0 0.0
    %80 = vmatpush2.msra.mxu0 0.0
    %81 = vmatprep.subr.mxu0 0.0
    %82 = vmatpush2.msra.mxu0 0.0
    %83 = vmatprep.subr.mxu0 0.0
    %84 = vmatpush2.msra.mxu0 0.0
    %85 = vmatprep.subr.mxu0 0.0
    %86 = vmatpush2.msra.mxu0 0.0
    %87 = vmatprep.subr.mxu0 0.0
    %88 = vmatpush2.msra.mxu0 0.0
    %89 = vmatprep.subr.mxu0 0.0
    %90 = vmatpush2.msra.mxu0 0.0
    %91 = vmatprep.subr.mxu0 0.0
    %92 = vmatpush2.msra.mxu0 0.0
    %93 = vmatprep.mubr.f32.mxu0 0.0
    %94 = vmatmul.mubr.f32.gmra.mxu0 %v20
    %v95 = vpop.f32.mrf.mxu0
    %v96 = vadd.f32 0.0, %v95
    %v97 = vpop.f32.mrf.mxu0
    %v98 = vadd.f32 0.0, %v97
    %99 = vdwg.mxu0
    %100 = vmatprep.subr.mxu0 0.0
    %101 = vmatpush1.msra.mxu0 0.0
    %102 = vmatprep.subr.mxu0 0.0
    %103 = vmatpush1.msra.mxu0 0.0
    %104 = vmatprep.subr.mxu0 0.0
    %105 = vmatpush1.msra.mxu0 0.0
    %106 = vmatprep.subr.mxu0 0.0
    %107 = vmatpush1.msra.mxu0 0.0
    %108 = vmatprep.subr.mxu0 0.0
    %109 = vmatpush1.msra.mxu0 0.0
    %110 = vmatprep.subr.mxu0 0.0
    %111 = vmatpush1.msra.mxu0 0.0
    %112 = vmatprep.subr.mxu0 0.0
    %113 = vmatpush1.msra.mxu0 0.0
    %114 = vmatprep.subr.mxu0 0.0
    %115 = vmatpush1.msra.mxu0 0.0
    %116 = vmatprep.subr.mxu0 0.0
    %117 = vmatpush1.msra.mxu0 0.0
    %118 = vmatprep.subr.mxu0 0.0
    %119 = vmatpush1.msra.mxu0 0.0
    %120 = vmatprep.subr.mxu0 0.0
    %121 = vmatpush1.msra.mxu0 0.0
    %122 = vmatprep.subr.mxu0 0.0
    %123 = vmatpush1.msra.mxu0 0.0
    %124 = vmatprep.subr.mxu0 0.0
    %125 = vmatpush1.msra.mxu0 0.0
    %126 = vmatprep.subr.mxu0 0.0
    %127 = vmatpush1.msra.mxu0 0.0
    %128 = vmatprep.subr.mxu0 0.0
    %129 = vmatpush1.msra.mxu0 0.0
    %130 = vmatprep.subr.mxu0 0.0
    %131 = vmatpush1.msra.mxu0 %v27
    %132 = vmatprep.subr.mxu0 0.0
    %133 = vmatpush2.msra.mxu0 0.0
    %134 = vmatprep.subr.mxu0 0.0
    %135 = vmatpush2.msra.mxu0 0.0
    %136 = vmatprep.subr.mxu0 0.0
    %137 = vmatpush2.msra.mxu0 0.0
    %138 = vmatprep.subr.mxu0 0.0
    %139 = vmatpush2.msra.mxu0 0.0
    %140 = vmatprep.subr.mxu0 0.0
    %141 = vmatpush2.msra.mxu0 0.0
    %142 = vmatprep.subr.mxu0 0.0
    %143 = vmatpush2.msra.mxu0 0.0
    %144 = vmatprep.subr.mxu0 0.0
    %145 = vmatpush2.msra.mxu0 0.0
    %146 = vmatprep.subr.mxu0 0.0
    %147 = vmatpush2.msra.mxu0 0.0
    %148 = vmatprep.subr.mxu0 0.0
    %149 = vmatpush2.msra.mxu0 0.0
    %150 = vmatprep.subr.mxu0 0.0
    %151 = vmatpush2.msra.mxu0 0.0
    %152 = vmatprep.subr.mxu0 0.0
    %153 = vmatpush2.msra.mxu0 0.0
    %154 = vmatprep.subr.mxu0 0.0
    %155 = vmatpush2.msra.mxu0 0.0
    %156 = vmatprep.subr.mxu0 0.0
    %157 = vmatpush2.msra.mxu0 0.0
    %158 = vmatprep.subr.mxu0 0.0
    %159 = vmatpush2.msra.mxu0 0.0
    %160 = vmatprep.subr.mxu0 0.0
    %161 = vmatpush2.msra.mxu0 0.0
    %162 = vmatprep.subr.mxu0 0.0
    %163 = vmatpush2.msra.mxu0 0.0
    %164 = vmatprep.mubr.f32.mxu0 0.0
    %165 = vmatmul.mubr.f32.gmra.mxu0 %v20
    %v166 = vpop.f32.mrf.mxu0
    %v167 = vadd.f32 0.0, %v166
    %v168 = vpop.f32.mrf.mxu0
    %169 = vdwg.mxu0
    %v170 = vmul.f32 %v96, 0.70710677
    %171 = vmatprep.subr.mxu0 0.0
    %172 = vmatpush1.xpose.msra.mxu0 0.0
    %173 = vmatprep.subr.mxu0 0.0
    %174 = vmatpush1.xpose.msra.mxu0 0.0
    %175 = vmatprep.subr.mxu0 0.0
    %176 = vmatpush1.xpose.msra.mxu0 0.0
    %177 = vmatprep.subr.mxu0 0.0
    %178 = vmatpush1.xpose.msra.mxu0 0.0
    %179 = vmatprep.subr.mxu0 0.0
    %180 = vmatpush1.xpose.msra.mxu0 0.0
    %181 = vmatprep.subr.mxu0 0.0
    %182 = vmatpush1.xpose.msra.mxu0 0.0
    %183 = vmatprep.subr.mxu0 0.0
    %184 = vmatpush1.xpose.msra.mxu0 0.0
    %185 = vmatprep.subr.mxu0 0.0
    %186 = vmatpush1.xpose.msra.mxu0 0.0
    %187 = vmatprep.subr.mxu0 0.0
    %188 = vmatpush1.xpose.msra.mxu0 0.0
    %189 = vmatprep.subr.mxu0 0.0
    %190 = vmatpush1.xpose.msra.mxu0 0.0
    %191 = vmatprep.subr.mxu0 0.0
    %192 = vmatpush1.xpose.msra.mxu0 0.0
    %193 = vmatprep.subr.mxu0 0.0
    %194 = vmatpush1.xpose.msra.mxu0 0.0
    %195 = vmatprep.subr.mxu0 0.0
    %196 = vmatpush1.xpose.msra.mxu0 0.0
    %197 = vmatprep.subr.mxu0 0.0
    %198 = vmatpush1.xpose.msra.mxu0 0.0
    %199 = vmatprep.subr.mxu0 0.0
    %200 = vmatpush1.xpose.msra.mxu0 0.0
    %201 = vmatprep.subr.mxu0 0.0
    %202 = vmatpush1.xpose.msra.mxu0 %v98
    %203 = vmatprep.subr.mxu0 0.0
    %204 = vmatpush2.xpose.msra.mxu0 0.0
    %205 = vmatprep.subr.mxu0 0.0
    %206 = vmatpush2.xpose.msra.mxu0 0.0
    %207 = vmatprep.subr.mxu0 0.0
    %208 = vmatpush2.xpose.msra.mxu0 0.0
    %209 = vmatprep.subr.mxu0 0.0
    %210 = vmatpush2.xpose.msra.mxu0 0.0
    %211 = vmatprep.subr.mxu0 0.0
    %212 = vmatpush2.xpose.msra.mxu0 0.0
    %213 = vmatprep.subr.mxu0 0.0
    %214 = vmatpush2.xpose.msra.mxu0 0.0
    %215 = vmatprep.subr.mxu0 0.0
    %216 = vmatpush2.xpose.msra.mxu0 0.0
    %217 = vmatprep.subr.mxu0 0.0
    %218 = vmatpush2.xpose.msra.mxu0 0.0
    %219 = vmatprep.subr.mxu0 0.0
    %220 = vmatpush2.xpose.msra.mxu0 0.0
    %221 = vmatprep.subr.mxu0 0.0
    %222 = vmatpush2.xpose.msra.mxu0 0.0
    %223 = vmatprep.subr.mxu0 0.0
    %224 = vmatpush2.xpose.msra.mxu0 0.0
    %225 = vmatprep.subr.mxu0 0.0
    %226 = vmatpush2.xpose.msra.mxu0 0.0
    %227 = vmatprep.subr.mxu0 0.0
    %228 = vmatpush2.xpose.msra.mxu0 0.0
    %229 = vmatprep.subr.mxu0 0.0
    %230 = vmatpush2.xpose.msra.mxu0 0.0
    %231 = vmatprep.subr.mxu0 0.0
    %232 = vmatpush2.xpose.msra.mxu0 0.0
    %233 = vmatprep.subr.mxu0 0.0
    %234 = vmatpush2.xpose.msra.mxu0 0.0
    %235 = vmatprep.mubr.f32.mxu0 0.0
    %236 = vmatmul.mubr.f32.gmra.mxu0 %v170
    %v237 = vpop.f32.mrf.mxu0
    %v238 = vadd.f32 0.0, %v237
    %v239 = vpop.f32.mrf.mxu0
    %240 = vdwg.mxu0
    %vm241 = vcmask 46080
    %v242 = vsel %vm241, %v238, -inf
    %243 = vmax.xlane.f32.xlu0 %v242
    %v244 = vpop.xlane.xlu0 %243
    %v245 = vsub.f32 %v238, %v244
    %v246 = vmul.f32 %v245, 1.442695
    %v247 = vpow.pop %v246
    %v248 = vsel %vm241, %v247, 0.0
    %249 = vadd.xlane.f32.xlu0 %v248
    %v250 = vpop.xlane.xlu0 %249
    %vm251 = vcmask 48128
    %v253 = vsel %vm251, %v247, 0
    %vm255 = vcmask 1045504
    %v257 = vsel %vm255, %v167, 0
    %259 = vmatprep.subr.mxu0 0.0
    %260 = vmatpush1.msra.mxu0 0.0
    %261 = vmatprep.subr.mxu0 0.0
    %262 = vmatpush1.msra.mxu0 0.0
    %263 = vmatprep.subr.mxu0 0.0
    %264 = vmatpush1.msra.mxu0 0.0
    %265 = vmatprep.subr.mxu0 0.0
    %266 = vmatpush1.msra.mxu0 0.0
    %267 = vmatprep.subr.mxu0 0.0
    %268 = vmatpush1.msra.mxu0 0.0
    %269 = vmatprep.subr.mxu0 0.0
    %270 = vmatpush1.msra.mxu0 0.0
    %271 = vmatprep.subr.mxu0 0.0
    %272 = vmatpush1.msra.mxu0 0.0
    %273 = vmatprep.subr.mxu0 0.0
    %274 = vmatpush1.msra.mxu0 0.0
    %275 = vmatprep.subr.mxu0 0.0
    %276 = vmatpush1.msra.mxu0 0.0
    %277 = vmatprep.subr.mxu0 0.0
    %278 = vmatpush1.msra.mxu0 0.0
    %279 = vmatprep.subr.mxu0 0.0
    %280 = vmatpush1.msra.mxu0 0.0
    %281 = vmatprep.subr.mxu0 0.0
    %282 = vmatpush1.msra.mxu0 0.0
    %283 = vmatprep.subr.mxu0 0.0
    %284 = vmatpush1.msra.mxu0 0.0
    %285 = vmatprep.subr.mxu0 0.0
    %286 = vmatpush1.msra.mxu0 0.0
    %287 = vmatprep.subr.mxu0 0.0
    %288 = vmatpush1.msra.mxu0 0.0
    %289 = vmatprep.subr.mxu0 0.0
    %290 = vmatpush1.msra.mxu0 %v257
    %291 = vmatprep.subr.mxu0 0.0
    %292 = vmatpush2.msra.mxu0 0.0
    %293 = vmatprep.subr.mxu0 0.0
    %294 = vmatpush2.msra.mxu0 0.0
    %295 = vmatprep.subr.mxu0 0.0
    %296 = vmatpush2.msra.mxu0 0.0
    %297 = vmatprep.subr.mxu0 0.0
    %298 = vmatpush2.msra.mxu0 0.0
    %299 = vmatprep.subr.mxu0 0.0
    %300 = vmatpush2.msra.mxu0 0.0
    %301 = vmatprep.subr.mxu0 0.0
    %302 = vmatpush2.msra.mxu0 0.0
    %303 = vmatprep.subr.mxu0 0.0
    %304 = vmatpush2.msra.mxu0 0.0
    %305 = vmatprep.subr.mxu0 0.0
    %306 = vmatpush2.msra.mxu0 0.0
    %307 = vmatprep.subr.mxu0 0.0
    %308 = vmatpush2.msra.mxu0 0.0
    %309 = vmatprep.subr.mxu0 0.0
    %310 = vmatpush2.msra.mxu0 0.0
    %311 = vmatprep.subr.mxu0 0.0
    %312 = vmatpush2.msra.mxu0 0.0
    %313 = vmatprep.subr.mxu0 0.0
    %314 = vmatpush2.msra.mxu0 0.0
    %315 = vmatprep.subr.mxu0 0.0
    %316 = vmatpush2.msra.mxu0 0.0
    %317 = vmatprep.subr.mxu0 0.0
    %318 = vmatpush2.msra.mxu0 0.0
    %319 = vmatprep.subr.mxu0 0.0
    %320 = vmatpush2.msra.mxu0 0.0
    %321 = vmatprep.subr.mxu0 0.0
    %322 = vmatpush2.msra.mxu0 0.0
    %323 = vmatprep.mubr.f32.mxu0 0.0
    %324 = vmatmul.mubr.f32.gmra.mxu0 %v253
    %v325 = vpop.f32.mrf.mxu0
    %v326 = vadd.f32 0.0, %v325
    %v327 = vpop.f32.mrf.mxu0
    %328 = vdwg.mxu0
    %v329 = vrcp.pop %v250
    %v330 = vmul.f32 %v326, %v329
    %331 = vst [vmem:[#allocation2] sm:$0x3f] %v330
    // Predicated region
    $region10: #{tpu_custom_call.1} parent=1 // pred_check
      _
    $region11: #{tpu_custom_call.1} parent=1 // pred_check_branch
      %333 = sbr.rel (0) target = $region13
    $region12: #{tpu_custom_call.1} parent=1 // pred_region
      %s335 = ssub.s32 128, 128
      %336 = vsyncadd [#allocation3], %s335
      %s338 = sshll.u32 [#allocation2], 4
      %s339 = int_to_ptr.vmem [resolvable:$true] %s338
      %341 = dma.vmem_to_hbm [thread:$0]  %s339, 128, %s2, [#allocation3]
    $region13: #{tpu_custom_call.1} parent=1 // pred_fallthru
      _
    // Predicated region
    $region14: #{tpu_custom_call.1} parent=1 // pred_check
      _
    $region15: #{tpu_custom_call.1} parent=1 // pred_check_branch
      %343 = sbr.rel (0) target = $region17
    $region16: #{tpu_custom_call.1} parent=1 // pred_region
      %344 = dma.done [#allocation3], 128
    $region17: #{tpu_custom_call.1} parent=1 // pred_fallthru
      _
    %345 = vsyncpa [#allocation3], 1

</llo_original>
